<compile_context>
chip_gen: v7x
topology: tpu7x:2x2x1
jax: 0.10.0
libtpu: 0.0.40
codegen_flags: <defaults>
</compile_context>

<pallas_src>
import functools

import jax
import jax.numpy as jnp
from jax import lax
from jax.experimental import pallas as pl
from jax.experimental.pallas import tpu as pltpu


def _encoder_gather_kernel(tok_ref, len_ref, emb_hbm, out_ref, gbuf, sem,
                           *, blk_t, vocab, t_pad):
    """tok_ref: (B*T_pad,) i32 SMEM; len_ref: (B,) i32 SMEM;
    emb_hbm: (V, D_pad) f32 in HBM; out_ref: (blk_t, D_pad) f32 VMEM block;
    gbuf: (blk_t, D_pad) f32 VMEM scratch; sem: (blk_t,) DMA semaphores."""
    b = pl.program_id(0)
    j = pl.program_id(1)
    base = b * t_pad + j * blk_t

    # Issue all row-gather DMAs for this block up front so the blk_t copies
    # are in flight concurrently (amortizes HBM latency); the table is never
    # materialized as a VMEM block.
    for i in range(blk_t):
        tok = tok_ref[base + i]
        row = jnp.minimum(jnp.maximum(tok, 0), vocab - 1)   # clamp OOB ids
        pltpu.make_async_copy(
            emb_hbm.at[pl.ds(row, 1), :],
            gbuf.at[pl.ds(i, 1), :],
            sem.at[i],
        ).start()

    for i in range(blk_t):
        pltpu.make_async_copy(
            emb_hbm.at[pl.ds(0, 1), :],
            gbuf.at[pl.ds(i, 1), :],
            sem.at[i],
        ).wait()

    # Length mask computed in-kernel from SMEM lengths (no (N,1) aux inputs).
    t_idx = j * blk_t + lax.broadcasted_iota(jnp.int32, (blk_t, 1), 0)
    valid = t_idx < len_ref[b]
    out_ref[...] = jnp.where(valid, gbuf[...], 0.0)


def seq2seq_encoder_forward(src_tokens, src_lengths, embedding, *, blk_t=None):
    """src_tokens (B,T) int32, src_lengths (B,) int32, embedding (V,D) f32
    -> encoder_out (B, T, D) f32."""
    B, T = src_tokens.shape
    V, D = embedding.shape

    # Lane-dense hidden dim: pad D up to a multiple of 128 (unmasked vst).
    D_pad = ((D + 127) // 128) * 128
    emb = embedding.astype(jnp.float32)
    if D_pad != D:
        emb = jnp.pad(emb, ((0, 0), (0, D_pad - D)))

    # Rows per grid step (pad T so the grid divides evenly; padded positions
    # have t >= src_lengths[b] and are therefore zeroed by the mask).
    if blk_t is None:
        blk_t = min(T, 128)
    T_pad = pl.cdiv(T, blk_t) * blk_t
    tok = src_tokens.astype(jnp.int32)
    if T_pad != T:
        tok = jnp.pad(tok, ((0, 0), (0, T_pad - T)))
    tok_flat = tok.reshape(B * T_pad)          # 1-D SMEM (avoids 2-D padding)
    lens = src_lengths.astype(jnp.int32)

    kernel = functools.partial(
        _encoder_gather_kernel, blk_t=blk_t, vocab=V, t_pad=T_pad)

    out = pl.pallas_call(
        kernel,
        out_shape=jax.ShapeDtypeStruct((B, T_pad, D_pad), jnp.float32),
        grid_spec=pltpu.PrefetchScalarGridSpec(
            num_scalar_prefetch=2,                  # tok_flat, lens -> SMEM
            grid=(B, T_pad // blk_t),
            in_specs=[pl.BlockSpec(memory_space=pl.ANY)],   # table stays in HBM
            out_specs=pl.BlockSpec((None, blk_t, D_pad),
                                   lambda b, j, tok, lens: (b, j, 0)),
            scratch_shapes=[
                pltpu.VMEM((blk_t, D_pad), jnp.float32),    # gathered rows
                pltpu.SemaphoreType.DMA((blk_t,)),          # per-row DMA sems
            ],
        ),
        compiler_params=pltpu.CompilerParams(
            dimension_semantics=("parallel", "parallel")),  # v7x: 2 TCs
    )(tok_flat, lens, emb)

    return out[:, :T, :D]


if __name__ == "__main__":
    B, T, V, D = 2, 8, 16, 32   # batch=2, seq=8, vocab(dictionary)=16, hidden=32

    key = jax.random.PRNGKey(0)
    k_emb, k_tok = jax.random.split(key)

    # Deterministic "dictionary" embedding table (synthetic, not a checkpoint).
    embedding = jax.random.normal(k_emb, (V, D), dtype=jnp.float32)
    src_tokens = jax.random.randint(k_tok, (B, T), 0, V, dtype=jnp.int32)
    src_lengths = jnp.array([T, T - 3], dtype=jnp.int32)

    out = seq2seq_encoder_forward(src_tokens, src_lengths, embedding)
    out = jax.block_until_ready(out)

    # Pure-JAX reference for sanity.
    ref = embedding[src_tokens]                                   # (B, T, D)
    mask = (jnp.arange(T)[None, :] < src_lengths[:, None])[..., None]
    ref = jnp.where(mask, ref, 0.0)

    assert out.shape == (B, T, D)
    assert jnp.allclose(out, ref, atol=1e-5), "mismatch vs reference"
    print("KERNEL_OK")
</pallas_src>

<mosaic_0001>
module attributes {stable_mosaic.version = 11 : i64} {
  func.func @_encoder_gather_kernel(%arg0: i32, %arg1: i32, %arg2: memref<16xi32, #tpu.memory_space<smem>>, %arg3: memref<2xi32, #tpu.memory_space<smem>>, %arg4: memref<16x128xf32, #tpu.memory_space<any>>, %arg5: memref<1x8x128xf32, #tpu.memory_space<vmem>>, %arg6: memref<8x128xf32, #tpu.memory_space<vmem>>, %arg7: memref<8x!tpu.dma_semaphore, #tpu.memory_space<semaphore_mem>>) attributes {dimension_semantics = [#tpu.dimension_semantics<parallel>, #tpu.dimension_semantics<parallel>], iteration_bounds = array<i64: 2, 1>, scalar_prefetch = 2 : i64, scratch_operands = 2 : i64, tpu.core_type = #tpu.core_type<tc>, window_params = [{}, {transform_indices = @transform_1, window_bounds = array<i64: 1, 8, 128>}]} {
    %c8_i32 = arith.constant 8 : i32
    %0 = arith.muli %arg0, %c8_i32 : i32
    %c8_i32_0 = arith.constant 8 : i32
    %1 = arith.muli %arg1, %c8_i32_0 : i32
    %2 = arith.addi %0, %1 : i32
    %c0_i32 = arith.constant 0 : i32
    %3 = arith.addi %2, %c0_i32 : i32
    %4 = arith.index_cast %3 : i32 to index
    %5 = memref.load %arg2[%4] : memref<16xi32, #tpu.memory_space<smem>>
    %c0_i32_1 = arith.constant 0 : i32
    %6 = arith.maxsi %5, %c0_i32_1 : i32
    %c15_i32 = arith.constant 15 : i32
    %7 = arith.minsi %6, %c15_i32 : i32
    %c0_i32_2 = arith.constant 0 : i32
    %c0_i32_3 = arith.constant 0 : i32
    %8 = tpu.memref_slice %arg4[%7, %c0_i32_3] : memref<16x128xf32, #tpu.memory_space<any>> -> memref<1x128xf32, #tpu.memory_space<any>>
    %c0_i32_4 = arith.constant 0 : i32
    %c0_i32_5 = arith.constant 0 : i32
    %9 = tpu.memref_slice %arg6[%c0_i32_4, %c0_i32_5] : memref<8x128xf32, #tpu.memory_space<vmem>> -> memref<1x128xf32, #tpu.memory_space<vmem>>
    %10 = tpu.memref_slice %arg7[%c0_i32_2] : memref<8x!tpu.dma_semaphore, #tpu.memory_space<semaphore_mem>> -> memref<1x!tpu.dma_semaphore, #tpu.memory_space<semaphore_mem>>
    %11 = tpu.memref_squeeze %10 : memref<1x!tpu.dma_semaphore, #tpu.memory_space<semaphore_mem>> -> memref<!tpu.dma_semaphore, #tpu.memory_space<semaphore_mem>>
    tpu.enqueue_dma source(%8 : memref<1x128xf32, #tpu.memory_space<any>>) target(%9 : memref<1x128xf32, #tpu.memory_space<vmem>>) target_semaphore(%11 : memref<!tpu.dma_semaphore, #tpu.memory_space<semaphore_mem>>)
    %c1_i32 = arith.constant 1 : i32
    %12 = arith.addi %2, %c1_i32 : i32
    %13 = arith.index_cast %12 : i32 to index
    %14 = memref.load %arg2[%13] : memref<16xi32, #tpu.memory_space<smem>>
    %c0_i32_6 = arith.constant 0 : i32
    %15 = arith.maxsi %14, %c0_i32_6 : i32
    %c15_i32_7 = arith.constant 15 : i32
    %16 = arith.minsi %15, %c15_i32_7 : i32
    %c1_i32_8 = arith.constant 1 : i32
    %c0_i32_9 = arith.constant 0 : i32
    %17 = tpu.memref_slice %arg4[%16, %c0_i32_9] : memref<16x128xf32, #tpu.memory_space<any>> -> memref<1x128xf32, #tpu.memory_space<any>>
    %c1_i32_10 = arith.constant 1 : i32
    %c0_i32_11 = arith.constant 0 : i32
    %18 = tpu.memref_slice %arg6[%c1_i32_10, %c0_i32_11] : memref<8x128xf32, #tpu.memory_space<vmem>> -> memref<1x128xf32, #tpu.memory_space<vmem>>
    %19 = tpu.memref_slice %arg7[%c1_i32_8] : memref<8x!tpu.dma_semaphore, #tpu.memory_space<semaphore_mem>> -> memref<1x!tpu.dma_semaphore, #tpu.memory_space<semaphore_mem>>
    %20 = tpu.memref_squeeze %19 : memref<1x!tpu.dma_semaphore, #tpu.memory_space<semaphore_mem>> -> memref<!tpu.dma_semaphore, #tpu.memory_space<semaphore_mem>>
    tpu.enqueue_dma source(%17 : memref<1x128xf32, #tpu.memory_space<any>>) target(%18 : memref<1x128xf32, #tpu.memory_space<vmem>>) target_semaphore(%20 : memref<!tpu.dma_semaphore, #tpu.memory_space<semaphore_mem>>)
    %c2_i32 = arith.constant 2 : i32
    %21 = arith.addi %2, %c2_i32 : i32
    %22 = arith.index_cast %21 : i32 to index
    %23 = memref.load %arg2[%22] : memref<16xi32, #tpu.memory_space<smem>>
    %c0_i32_12 = arith.constant 0 : i32
    %24 = arith.maxsi %23, %c0_i32_12 : i32
    %c15_i32_13 = arith.constant 15 : i32
    %25 = arith.minsi %24, %c15_i32_13 : i32
    %c2_i32_14 = arith.constant 2 : i32
    %c0_i32_15 = arith.constant 0 : i32
    %26 = tpu.memref_slice %arg4[%25, %c0_i32_15] : memref<16x128xf32, #tpu.memory_space<any>> -> memref<1x128xf32, #tpu.memory_space<any>>
    %c2_i32_16 = arith.constant 2 : i32
    %c0_i32_17 = arith.constant 0 : i32
    %27 = tpu.memref_slice %arg6[%c2_i32_16, %c0_i32_17] : memref<8x128xf32, #tpu.memory_space<vmem>> -> memref<1x128xf32, #tpu.memory_space<vmem>>
    %28 = tpu.memref_slice %arg7[%c2_i32_14] : memref<8x!tpu.dma_semaphore, #tpu.memory_space<semaphore_mem>> -> memref<1x!tpu.dma_semaphore, #tpu.memory_space<semaphore_mem>>
    %29 = tpu.memref_squeeze %28 : memref<1x!tpu.dma_semaphore, #tpu.memory_space<semaphore_mem>> -> memref<!tpu.dma_semaphore, #tpu.memory_space<semaphore_mem>>
    tpu.enqueue_dma source(%26 : memref<1x128xf32, #tpu.memory_space<any>>) target(%27 : memref<1x128xf32, #tpu.memory_space<vmem>>) target_semaphore(%29 : memref<!tpu.dma_semaphore, #tpu.memory_space<semaphore_mem>>)
    %c3_i32 = arith.constant 3 : i32
    %30 = arith.addi %2, %c3_i32 : i32
    %31 = arith.index_cast %30 : i32 to index
    %32 = memref.load %arg2[%31] : memref<16xi32, #tpu.memory_space<smem>>
    %c0_i32_18 = arith.constant 0 : i32
    %33 = arith.maxsi %32, %c0_i32_18 : i32
    %c15_i32_19 = arith.constant 15 : i32
    %34 = arith.minsi %33, %c15_i32_19 : i32
    %c3_i32_20 = arith.constant 3 : i32
    %c0_i32_21 = arith.constant 0 : i32
    %35 = tpu.memref_slice %arg4[%34, %c0_i32_21] : memref<16x128xf32, #tpu.memory_space<any>> -> memref<1x128xf32, #tpu.memory_space<any>>
    %c3_i32_22 = arith.constant 3 : i32
    %c0_i32_23 = arith.constant 0 : i32
    %36 = tpu.memref_slice %arg6[%c3_i32_22, %c0_i32_23] : memref<8x128xf32, #tpu.memory_space<vmem>> -> memref<1x128xf32, #tpu.memory_space<vmem>>
    %37 = tpu.memref_slice %arg7[%c3_i32_20] : memref<8x!tpu.dma_semaphore, #tpu.memory_space<semaphore_mem>> -> memref<1x!tpu.dma_semaphore, #tpu.memory_space<semaphore_mem>>
    %38 = tpu.memref_squeeze %37 : memref<1x!tpu.dma_semaphore, #tpu.memory_space<semaphore_mem>> -> memref<!tpu.dma_semaphore, #tpu.memory_space<semaphore_mem>>
    tpu.enqueue_dma source(%35 : memref<1x128xf32, #tpu.memory_space<any>>) target(%36 : memref<1x128xf32, #tpu.memory_space<vmem>>) target_semaphore(%38 : memref<!tpu.dma_semaphore, #tpu.memory_space<semaphore_mem>>)
    %c4_i32 = arith.constant 4 : i32
    %39 = arith.addi %2, %c4_i32 : i32
    %40 = arith.index_cast %39 : i32 to index
    %41 = memref.load %arg2[%40] : memref<16xi32, #tpu.memory_space<smem>>
    %c0_i32_24 = arith.constant 0 : i32
    %42 = arith.maxsi %41, %c0_i32_24 : i32
    %c15_i32_25 = arith.constant 15 : i32
    %43 = arith.minsi %42, %c15_i32_25 : i32
    %c4_i32_26 = arith.constant 4 : i32
    %c0_i32_27 = arith.constant 0 : i32
    %44 = tpu.memref_slice %arg4[%43, %c0_i32_27] : memref<16x128xf32, #tpu.memory_space<any>> -> memref<1x128xf32, #tpu.memory_space<any>>
    %c4_i32_28 = arith.constant 4 : i32
    %c0_i32_29 = arith.constant 0 : i32
    %45 = tpu.memref_slice %arg6[%c4_i32_28, %c0_i32_29] : memref<8x128xf32, #tpu.memory_space<vmem>> -> memref<1x128xf32, #tpu.memory_space<vmem>>
    %46 = tpu.memref_slice %arg7[%c4_i32_26] : memref<8x!tpu.dma_semaphore, #tpu.memory_space<semaphore_mem>> -> memref<1x!tpu.dma_semaphore, #tpu.memory_space<semaphore_mem>>
    %47 = tpu.memref_squeeze %46 : memref<1x!tpu.dma_semaphore, #tpu.memory_space<semaphore_mem>> -> memref<!tpu.dma_semaphore, #tpu.memory_space<semaphore_mem>>
    tpu.enqueue_dma source(%44 : memref<1x128xf32, #tpu.memory_space<any>>) target(%45 : memref<1x128xf32, #tpu.memory_space<vmem>>) target_semaphore(%47 : memref<!tpu.dma_semaphore, #tpu.memory_space<semaphore_mem>>)
    %c5_i32 = arith.constant 5 : i32
    %48 = arith.addi %2, %c5_i32 : i32
    %49 = arith.index_cast %48 : i32 to index
    %50 = memref.load %arg2[%49] : memref<16xi32, #tpu.memory_space<smem>>
    %c0_i32_30 = arith.constant 0 : i32
    %51 = arith.maxsi %50, %c0_i32_30 : i32
    %c15_i32_31 = arith.constant 15 : i32
    %52 = arith.minsi %51, %c15_i32_31 : i32
    %c5_i32_32 = arith.constant 5 : i32
    %c0_i32_33 = arith.constant 0 : i32
    %53 = tpu.memref_slice %arg4[%52, %c0_i32_33] : memref<16x128xf32, #tpu.memory_space<any>> -> memref<1x128xf32, #tpu.memory_space<any>>
    %c5_i32_34 = arith.constant 5 : i32
    %c0_i32_35 = arith.constant 0 : i32
    %54 = tpu.memref_slice %arg6[%c5_i32_34, %c0_i32_35] : memref<8x128xf32, #tpu.memory_space<vmem>> -> memref<1x128xf32, #tpu.memory_space<vmem>>
    %55 = tpu.memref_slice %arg7[%c5_i32_32] : memref<8x!tpu.dma_semaphore, #tpu.memory_space<semaphore_mem>> -> memref<1x!tpu.dma_semaphore, #tpu.memory_space<semaphore_mem>>
    %56 = tpu.memref_squeeze %55 : memref<1x!tpu.dma_semaphore, #tpu.memory_space<semaphore_mem>> -> memref<!tpu.dma_semaphore, #tpu.memory_space<semaphore_mem>>
    tpu.enqueue_dma source(%53 : memref<1x128xf32, #tpu.memory_space<any>>) target(%54 : memref<1x128xf32, #tpu.memory_space<vmem>>) target_semaphore(%56 : memref<!tpu.dma_semaphore, #tpu.memory_space<semaphore_mem>>)
    %c6_i32 = arith.constant 6 : i32
    %57 = arith.addi %2, %c6_i32 : i32
    %58 = arith.index_cast %57 : i32 to index
    %59 = memref.load %arg2[%58] : memref<16xi32, #tpu.memory_space<smem>>
    %c0_i32_36 = arith.constant 0 : i32
    %60 = arith.maxsi %59, %c0_i32_36 : i32
    %c15_i32_37 = arith.constant 15 : i32
    %61 = arith.minsi %60, %c15_i32_37 : i32
    %c6_i32_38 = arith.constant 6 : i32
    %c0_i32_39 = arith.constant 0 : i32
    %62 = tpu.memref_slice %arg4[%61, %c0_i32_39] : memref<16x128xf32, #tpu.memory_space<any>> -> memref<1x128xf32, #tpu.memory_space<any>>
    %c6_i32_40 = arith.constant 6 : i32
    %c0_i32_41 = arith.constant 0 : i32
    %63 = tpu.memref_slice %arg6[%c6_i32_40, %c0_i32_41] : memref<8x128xf32, #tpu.memory_space<vmem>> -> memref<1x128xf32, #tpu.memory_space<vmem>>
    %64 = tpu.memref_slice %arg7[%c6_i32_38] : memref<8x!tpu.dma_semaphore, #tpu.memory_space<semaphore_mem>> -> memref<1x!tpu.dma_semaphore, #tpu.memory_space<semaphore_mem>>
    %65 = tpu.memref_squeeze %64 : memref<1x!tpu.dma_semaphore, #tpu.memory_space<semaphore_mem>> -> memref<!tpu.dma_semaphore, #tpu.memory_space<semaphore_mem>>
    tpu.enqueue_dma source(%62 : memref<1x128xf32, #tpu.memory_space<any>>) target(%63 : memref<1x128xf32, #tpu.memory_space<vmem>>) target_semaphore(%65 : memref<!tpu.dma_semaphore, #tpu.memory_space<semaphore_mem>>)
    %c7_i32 = arith.constant 7 : i32
    %66 = arith.addi %2, %c7_i32 : i32
    %67 = arith.index_cast %66 : i32 to index
    %68 = memref.load %arg2[%67] : memref<16xi32, #tpu.memory_space<smem>>
    %c0_i32_42 = arith.constant 0 : i32
    %69 = arith.maxsi %68, %c0_i32_42 : i32
    %c15_i32_43 = arith.constant 15 : i32
    %70 = arith.minsi %69, %c15_i32_43 : i32
    %c7_i32_44 = arith.constant 7 : i32
    %c0_i32_45 = arith.constant 0 : i32
    %71 = tpu.memref_slice %arg4[%70, %c0_i32_45] : memref<16x128xf32, #tpu.memory_space<any>> -> memref<1x128xf32, #tpu.memory_space<any>>
    %c7_i32_46 = arith.constant 7 : i32
    %c0_i32_47 = arith.constant 0 : i32
    %72 = tpu.memref_slice %arg6[%c7_i32_46, %c0_i32_47] : memref<8x128xf32, #tpu.memory_space<vmem>> -> memref<1x128xf32, #tpu.memory_space<vmem>>
    %73 = tpu.memref_slice %arg7[%c7_i32_44] : memref<8x!tpu.dma_semaphore, #tpu.memory_space<semaphore_mem>> -> memref<1x!tpu.dma_semaphore, #tpu.memory_space<semaphore_mem>>
    %74 = tpu.memref_squeeze %73 : memref<1x!tpu.dma_semaphore, #tpu.memory_space<semaphore_mem>> -> memref<!tpu.dma_semaphore, #tpu.memory_space<semaphore_mem>>
    tpu.enqueue_dma source(%71 : memref<1x128xf32, #tpu.memory_space<any>>) target(%72 : memref<1x128xf32, #tpu.memory_space<vmem>>) target_semaphore(%74 : memref<!tpu.dma_semaphore, #tpu.memory_space<semaphore_mem>>)
    %c0_i32_48 = arith.constant 0 : i32
    %c0_i32_49 = arith.constant 0 : i32
    %c0_i32_50 = arith.constant 0 : i32
    %75 = tpu.memref_slice %arg4[%c0_i32_49, %c0_i32_50] : memref<16x128xf32, #tpu.memory_space<any>> -> memref<1x128xf32, #tpu.memory_space<any>>
    %c0_i32_51 = arith.constant 0 : i32
    %c0_i32_52 = arith.constant 0 : i32
    %76 = tpu.memref_slice %arg6[%c0_i32_51, %c0_i32_52] : memref<8x128xf32, #tpu.memory_space<vmem>> -> memref<1x128xf32, #tpu.memory_space<vmem>>
    %77 = tpu.memref_slice %arg7[%c0_i32_48] : memref<8x!tpu.dma_semaphore, #tpu.memory_space<semaphore_mem>> -> memref<1x!tpu.dma_semaphore, #tpu.memory_space<semaphore_mem>>
    %78 = tpu.memref_squeeze %77 : memref<1x!tpu.dma_semaphore, #tpu.memory_space<semaphore_mem>> -> memref<!tpu.dma_semaphore, #tpu.memory_space<semaphore_mem>>
    tpu.wait_dma2 semaphore(%78 : memref<!tpu.dma_semaphore, #tpu.memory_space<semaphore_mem>>) src(%75 : memref<1x128xf32, #tpu.memory_space<any>>) dst(%76 : memref<1x128xf32, #tpu.memory_space<vmem>>)
    %c1_i32_53 = arith.constant 1 : i32
    %c0_i32_54 = arith.constant 0 : i32
    %c0_i32_55 = arith.constant 0 : i32
    %79 = tpu.memref_slice %arg4[%c0_i32_54, %c0_i32_55] : memref<16x128xf32, #tpu.memory_space<any>> -> memref<1x128xf32, #tpu.memory_space<any>>
    %c1_i32_56 = arith.constant 1 : i32
    %c0_i32_57 = arith.constant 0 : i32
    %80 = tpu.memref_slice %arg6[%c1_i32_56, %c0_i32_57] : memref<8x128xf32, #tpu.memory_space<vmem>> -> memref<1x128xf32, #tpu.memory_space<vmem>>
    %81 = tpu.memref_slice %arg7[%c1_i32_53] : memref<8x!tpu.dma_semaphore, #tpu.memory_space<semaphore_mem>> -> memref<1x!tpu.dma_semaphore, #tpu.memory_space<semaphore_mem>>
    %82 = tpu.memref_squeeze %81 : memref<1x!tpu.dma_semaphore, #tpu.memory_space<semaphore_mem>> -> memref<!tpu.dma_semaphore, #tpu.memory_space<semaphore_mem>>
    tpu.wait_dma2 semaphore(%82 : memref<!tpu.dma_semaphore, #tpu.memory_space<semaphore_mem>>) src(%79 : memref<1x128xf32, #tpu.memory_space<any>>) dst(%80 : memref<1x128xf32, #tpu.memory_space<vmem>>)
    %c2_i32_58 = arith.constant 2 : i32
    %c0_i32_59 = arith.constant 0 : i32
    %c0_i32_60 = arith.constant 0 : i32
    %83 = tpu.memref_slice %arg4[%c0_i32_59, %c0_i32_60] : memref<16x128xf32, #tpu.memory_space<any>> -> memref<1x128xf32, #tpu.memory_space<any>>
    %c2_i32_61 = arith.constant 2 : i32
    %c0_i32_62 = arith.constant 0 : i32
    %84 = tpu.memref_slice %arg6[%c2_i32_61, %c0_i32_62] : memref<8x128xf32, #tpu.memory_space<vmem>> -> memref<1x128xf32, #tpu.memory_space<vmem>>
    %85 = tpu.memref_slice %arg7[%c2_i32_58] : memref<8x!tpu.dma_semaphore, #tpu.memory_space<semaphore_mem>> -> memref<1x!tpu.dma_semaphore, #tpu.memory_space<semaphore_mem>>
    %86 = tpu.memref_squeeze %85 : memref<1x!tpu.dma_semaphore, #tpu.memory_space<semaphore_mem>> -> memref<!tpu.dma_semaphore, #tpu.memory_space<semaphore_mem>>
    tpu.wait_dma2 semaphore(%86 : memref<!tpu.dma_semaphore, #tpu.memory_space<semaphore_mem>>) src(%83 : memref<1x128xf32, #tpu.memory_space<any>>) dst(%84 : memref<1x128xf32, #tpu.memory_space<vmem>>)
    %c3_i32_63 = arith.constant 3 : i32
    %c0_i32_64 = arith.constant 0 : i32
    %c0_i32_65 = arith.constant 0 : i32
    %87 = tpu.memref_slice %arg4[%c0_i32_64, %c0_i32_65] : memref<16x128xf32, #tpu.memory_space<any>> -> memref<1x128xf32, #tpu.memory_space<any>>
    %c3_i32_66 = arith.constant 3 : i32
    %c0_i32_67 = arith.constant 0 : i32
    %88 = tpu.memref_slice %arg6[%c3_i32_66, %c0_i32_67] : memref<8x128xf32, #tpu.memory_space<vmem>> -> memref<1x128xf32, #tpu.memory_space<vmem>>
    %89 = tpu.memref_slice %arg7[%c3_i32_63] : memref<8x!tpu.dma_semaphore, #tpu.memory_space<semaphore_mem>> -> memref<1x!tpu.dma_semaphore, #tpu.memory_space<semaphore_mem>>
    %90 = tpu.memref_squeeze %89 : memref<1x!tpu.dma_semaphore, #tpu.memory_space<semaphore_mem>> -> memref<!tpu.dma_semaphore, #tpu.memory_space<semaphore_mem>>
    tpu.wait_dma2 semaphore(%90 : memref<!tpu.dma_semaphore, #tpu.memory_space<semaphore_mem>>) src(%87 : memref<1x128xf32, #tpu.memory_space<any>>) dst(%88 : memref<1x128xf32, #tpu.memory_space<vmem>>)
    %c4_i32_68 = arith.constant 4 : i32
    %c0_i32_69 = arith.constant 0 : i32
    %c0_i32_70 = arith.constant 0 : i32
    %91 = tpu.memref_slice %arg4[%c0_i32_69, %c0_i32_70] : memref<16x128xf32, #tpu.memory_space<any>> -> memref<1x128xf32, #tpu.memory_space<any>>
    %c4_i32_71 = arith.constant 4 : i32
    %c0_i32_72 = arith.constant 0 : i32
    %92 = tpu.memref_slice %arg6[%c4_i32_71, %c0_i32_72] : memref<8x128xf32, #tpu.memory_space<vmem>> -> memref<1x128xf32, #tpu.memory_space<vmem>>
    %93 = tpu.memref_slice %arg7[%c4_i32_68] : memref<8x!tpu.dma_semaphore, #tpu.memory_space<semaphore_mem>> -> memref<1x!tpu.dma_semaphore, #tpu.memory_space<semaphore_mem>>
    %94 = tpu.memref_squeeze %93 : memref<1x!tpu.dma_semaphore, #tpu.memory_space<semaphore_mem>> -> memref<!tpu.dma_semaphore, #tpu.memory_space<semaphore_mem>>
    tpu.wait_dma2 semaphore(%94 : memref<!tpu.dma_semaphore, #tpu.memory_space<semaphore_mem>>) src(%91 : memref<1x128xf32, #tpu.memory_space<any>>) dst(%92 : memref<1x128xf32, #tpu.memory_space<vmem>>)
    %c5_i32_73 = arith.constant 5 : i32
    %c0_i32_74 = arith.constant 0 : i32
    %c0_i32_75 = arith.constant 0 : i32
    %95 = tpu.memref_slice %arg4[%c0_i32_74, %c0_i32_75] : memref<16x128xf32, #tpu.memory_space<any>> -> memref<1x128xf32, #tpu.memory_space<any>>
    %c5_i32_76 = arith.constant 5 : i32
    %c0_i32_77 = arith.constant 0 : i32
    %96 = tpu.memref_slice %arg6[%c5_i32_76, %c0_i32_77] : memref<8x128xf32, #tpu.memory_space<vmem>> -> memref<1x128xf32, #tpu.memory_space<vmem>>
    %97 = tpu.memref_slice %arg7[%c5_i32_73] : memref<8x!tpu.dma_semaphore, #tpu.memory_space<semaphore_mem>> -> memref<1x!tpu.dma_semaphore, #tpu.memory_space<semaphore_mem>>
    %98 = tpu.memref_squeeze %97 : memref<1x!tpu.dma_semaphore, #tpu.memory_space<semaphore_mem>> -> memref<!tpu.dma_semaphore, #tpu.memory_space<semaphore_mem>>
    tpu.wait_dma2 semaphore(%98 : memref<!tpu.dma_semaphore, #tpu.memory_space<semaphore_mem>>) src(%95 : memref<1x128xf32, #tpu.memory_space<any>>) dst(%96 : memref<1x128xf32, #tpu.memory_space<vmem>>)
    %c6_i32_78 = arith.constant 6 : i32
    %c0_i32_79 = arith.constant 0 : i32
    %c0_i32_80 = arith.constant 0 : i32
    %99 = tpu.memref_slice %arg4[%c0_i32_79, %c0_i32_80] : memref<16x128xf32, #tpu.memory_space<any>> -> memref<1x128xf32, #tpu.memory_space<any>>
    %c6_i32_81 = arith.constant 6 : i32
    %c0_i32_82 = arith.constant 0 : i32
    %100 = tpu.memref_slice %arg6[%c6_i32_81, %c0_i32_82] : memref<8x128xf32, #tpu.memory_space<vmem>> -> memref<1x128xf32, #tpu.memory_space<vmem>>
    %101 = tpu.memref_slice %arg7[%c6_i32_78] : memref<8x!tpu.dma_semaphore, #tpu.memory_space<semaphore_mem>> -> memref<1x!tpu.dma_semaphore, #tpu.memory_space<semaphore_mem>>
    %102 = tpu.memref_squeeze %101 : memref<1x!tpu.dma_semaphore, #tpu.memory_space<semaphore_mem>> -> memref<!tpu.dma_semaphore, #tpu.memory_space<semaphore_mem>>
    tpu.wait_dma2 semaphore(%102 : memref<!tpu.dma_semaphore, #tpu.memory_space<semaphore_mem>>) src(%99 : memref<1x128xf32, #tpu.memory_space<any>>) dst(%100 : memref<1x128xf32, #tpu.memory_space<vmem>>)
    %c7_i32_83 = arith.constant 7 : i32
    %c0_i32_84 = arith.constant 0 : i32
    %c0_i32_85 = arith.constant 0 : i32
    %103 = tpu.memref_slice %arg4[%c0_i32_84, %c0_i32_85] : memref<16x128xf32, #tpu.memory_space<any>> -> memref<1x128xf32, #tpu.memory_space<any>>
    %c7_i32_86 = arith.constant 7 : i32
    %c0_i32_87 = arith.constant 0 : i32
    %104 = tpu.memref_slice %arg6[%c7_i32_86, %c0_i32_87] : memref<8x128xf32, #tpu.memory_space<vmem>> -> memref<1x128xf32, #tpu.memory_space<vmem>>
    %105 = tpu.memref_slice %arg7[%c7_i32_83] : memref<8x!tpu.dma_semaphore, #tpu.memory_space<semaphore_mem>> -> memref<1x!tpu.dma_semaphore, #tpu.memory_space<semaphore_mem>>
    %106 = tpu.memref_squeeze %105 : memref<1x!tpu.dma_semaphore, #tpu.memory_space<semaphore_mem>> -> memref<!tpu.dma_semaphore, #tpu.memory_space<semaphore_mem>>
    tpu.wait_dma2 semaphore(%106 : memref<!tpu.dma_semaphore, #tpu.memory_space<semaphore_mem>>) src(%103 : memref<1x128xf32, #tpu.memory_space<any>>) dst(%104 : memref<1x128xf32, #tpu.memory_space<vmem>>)
    %c8_i32_88 = arith.constant 8 : i32
    %107 = arith.muli %arg1, %c8_i32_88 : i32
    %108 = tpu.iota {dimensions = array<i32: 0>} : vector<8x1xi32>
    %109 = vector.broadcast %107 : i32 to vector<8x1xi32>
    %110 = arith.addi %109, %108 : vector<8x1xi32>
    %111 = arith.index_cast %arg0 : i32 to index
    %112 = memref.load %arg3[%111] : memref<2xi32, #tpu.memory_space<smem>>
    %113 = vector.broadcast %112 : i32 to vector<8x1xi32>
    %114 = arith.cmpi slt, %110, %113 : vector<8x1xi32>
    %c0 = arith.constant 0 : index
    %c0_89 = arith.constant 0 : index
    %115 = vector.load %arg6[%c0, %c0_89] : memref<8x128xf32, #tpu.memory_space<vmem>>, vector<8x128xf32>
    %cst = arith.constant 0.000000e+00 : f32
    %116 = vector.shape_cast %114 : vector<8x1xi1> to vector<8x1xi1>
    %117 = vector.broadcast %116 : vector<8x1xi1> to vector<8x128xi1>
    %118 = vector.broadcast %cst : f32 to vector<8x128xf32>
    %119 = arith.select %117, %115, %118 : vector<8x128xi1>, vector<8x128xf32>
    %c0_90 = arith.constant 0 : index
    %c0_91 = arith.constant 0 : index
    %c0_92 = arith.constant 0 : index
    %120 = vector.load %arg5[%c0_90, %c0_91, %c0_92] : memref<1x8x128xf32, #tpu.memory_space<vmem>>, vector<1x8x128xf32>
    %121 = vector.shape_cast %120 : vector<1x8x128xf32> to vector<8x128xf32>
    %122 = vector.shape_cast %119 : vector<8x128xf32> to vector<1x8x128xf32>
    tpu.vector_store %arg5[%c0_90, %c0_91, %c0_92], %122 {strides = array<i32>} : memref<1x8x128xf32, #tpu.memory_space<vmem>>, vector<1x8x128xf32>,
    return
  }
  func.func @transform_1(%arg0: i32, %arg1: i32, %arg2: memref<16xi32, #tpu.memory_space<smem>>, %arg3: memref<2xi32, #tpu.memory_space<smem>>) -> (i32, i32, i32) {
    %c0_i32 = arith.constant 0 : i32
    %c0_i32_0 = arith.constant 0 : i32
    return %arg0, %arg1, %c0_i32 : i32, i32, i32
  }
}

</mosaic_0001>

<llo_original>
// kernel: tpu_custom_call.1
$region0: #{tpu_custom_call.1}
  #allocation0 [shape = 'u32[]', space=smem, size = 0x4, offset = 0x4, fixed_abs, tag = 'smem constant byte address 0x4 - core index']
  #allocation1 [shape = 'u32[144,128]{1,0:T(1,128)}', space=vmem, size = 0x12000, scoped, tag = 'internal scratch']
  #allocation2 [shape = 'f32[8,128]{1,0:T(8,128)}', space=vmem, size = 0x1000, scoped, tag = 'scratch operand']
  #allocation3 [shape = 's32[8]{0}', space=sflag, size = 0x20, scoped, tag = 'scratch operand']
  #allocation4 [shape = 's32[1]{0}', space=sflag, size = 0x4, scoped, tag = 'scoped memory for tpu_custom_call.1']
  #allocation5 [shape = 'u8[512]{0}', space=smem, size = 0x200, scoped, tag = 'prefetched SMEM operand 0']
  #allocation6 [shape = 'u8[512]{0}', space=smem, size = 0x200, scoped, tag = 'prefetched SMEM operand 1']
  #allocation9 [shape = 's32[]', space=sflag, size = 0x4, offset = 0, fixed_abs, tag = 'sflag constant byte address 0x0 - dummy sync flag']
  #allocation10 [shape = 's32[]', space=sflag, size = 0x4, offset = 0, fixed_abs, tag = 'sflag constant byte address 0x0 - dummy sync flag']
  #allocation11 [shape = 'u32[]', space=smem, size = 0x4, offset = 0x44, fixed_abs, tag = 'smem constant byte address 0x44 - assertion arg 0']
  #allocation12 [shape = 'u32[]', space=smem, size = 0x4, offset = 0x48, fixed_abs, tag = 'smem constant byte address 0x48 - assertion arg 1']
  #allocation13 [shape = 's32[]', space=sflag, size = 0x4, offset = 0, fixed_abs, tag = 'sflag constant byte address 0x0 - dummy sync flag']
  #allocation14 [shape = 's32[]', space=sflag, size = 0x4, offset = 0, fixed_abs, tag = 'sflag constant byte address 0x0 - dummy sync flag']
  #allocation15 [shape = 's32[]', space=sflag, size = 0x4, offset = 0, fixed_abs, tag = 'sflag constant byte address 0x0 - dummy sync flag']
  #allocation16 [shape = 's32[]', space=sflag, size = 0x4, offset = 0, fixed_abs, tag = 'sflag constant byte address 0x0 - dummy sync flag']
  #allocation17 [shape = 's32[]', space=sflag, size = 0x4, offset = 0, fixed_abs, tag = 'sflag constant byte address 0x0 - dummy sync flag']
  #allocation18 [shape = 's32[]', space=sflag, size = 0x4, offset = 0, fixed_abs, tag = 'sflag constant byte address 0x0 - dummy sync flag']
  #allocation19 [shape = 's32[]', space=sflag, size = 0x4, offset = 0, fixed_abs, tag = 'sflag constant byte address 0x0 - dummy sync flag']
  #allocation20 [shape = 's32[]', space=sflag, size = 0x4, offset = 0, fixed_abs, tag = 'sflag constant byte address 0x0 - dummy sync flag']
  #allocation21 [shape = 's32[]', space=sflag, size = 0x4, offset = 0, fixed_abs, tag = 'sflag constant byte address 0x0 - dummy sync flag']
  #allocation22 [shape = 's32[]', space=sflag, size = 0x4, offset = 0, fixed_abs, tag = 'sflag constant byte address 0x0 - dummy sync flag']
  #allocation23 [shape = 's32[]', space=sflag, size = 0x4, offset = 0, fixed_abs, tag = 'sflag constant byte address 0x0 - dummy sync flag']
  #allocation24 [shape = 's32[]', space=sflag, size = 0x4, offset = 0, fixed_abs, tag = 'sflag constant byte address 0x0 - dummy sync flag']
  #allocation25 [shape = 's32[]', space=sflag, size = 0x4, offset = 0, fixed_abs, tag = 'sflag constant byte address 0x0 - dummy sync flag']
  #allocation26 [shape = 's32[]', space=sflag, size = 0x4, offset = 0, fixed_abs, tag = 'sflag constant byte address 0x0 - dummy sync flag']
  %s0 = inlined_call_operand.hbm [shape: s32[16], index: 0, kind: input, shape index: {}]
  %s1 = inlined_call_operand.vmem [shape: s32[2], index: 1, kind: input, shape index: {}]
  %s2 = inlined_call_operand.hbm [shape: f32[16,128], index: 2, kind: input, shape index: {}]
  %s3 = inlined_call_operand.hbm [shape: f32[2,8,128], index: 3, kind: output, shape index: {}]
  %s4 = sld [smem:[#allocation0]]
  $region57: #{tpu_custom_call.1} parent=0
    _
  %s6 = ssub.s32 1, %s4
  %s7 = scalar_select 0, %s6, %s4
  %9 = dma.hbm_to_smem %s0, 16, [#allocation5], [#allocation4]
  %s10 = sshll.u32 %s1, 4
  %s11 = int_to_ptr.vmem [resolvable:$true] %s10
  %13 = dma.vmem_to_smem %s11, 16, [#allocation6], [#allocation4]
  %14 = dma.done [#allocation4], 32
  %15 = sfence
  $region1: #{tpu_custom_call.1} parent=0
    #allocation7 [shape = 'u8[8192]{0}', space=vmem, size = 0x2000, scoped, tag = 'output window, operand 0']
    #allocation8 [shape = 's32[2]{0}', space=sflag, size = 0x8, scoped, tag = 'scoped memory for tpu_custom_call.1']
    %16 = vsyncpa [#allocation8], 0
    %s17 = scalar_lea.sflag [#allocation8], 1
    %18 = vsyncpa %s17, 0
    loop: start=0, step=1, limit=3
    $region2: #{tpu_custom_call.1} parent=1 // loop_pre_header
      _
    $region3: #{tpu_custom_call.1} parent=1 // loop_header
      %s20 = sphi 0, %s24
      %p21 = scmp.ge.s32.totalorder %s20, 3
      %s26 = sphi 0, %s36
      %s27 = sphi 0, %s32
      %s28 = sphi 0, %s26
      %s29 = sphi 0, %s27
      %s41 = sphi 0, %s43
      %s44 = sphi 0, %s41
      %s54 = sphi 0, %s44
    $region4: #{tpu_custom_call.1} parent=1 // loop_header_branch
      %23 = sbr.rel (%p21) target = $region8
    $region5: #{tpu_custom_call.1} parent=1 // loop_body
      %s25 = ssub.s32 %s20, 1
      %s30 = sadd.s32 1, %s27
      %p31 = scmp.ge.s32.totalorder %s30, 1
      %s32 = scalar_select %p31, 0, %s30
      %s33 = sadd.s32 1, %s26
      %s34 = scalar_select %p31, %s33, %s26
      %p35 = scmp.ge.s32.totalorder %s34, 2
      %s36 = scalar_select %p35, 0, %s34
      %s37 = ssub.s32 %s26, %s36
      %s38 = ssub.s32 %s27, %s32
      %s39 = sor.u32 %s37, %s38
      %p40 = scmp.eq.s32.totalorder %s39, 0
      %s42 = sadd.s32 %s41, 1
      %s43 = scalar_select %p40, %s41, %s42
      %p45 = pneg %p40
      %p46 = scmp.eq.s32.totalorder %s20, 1
      %p47 = por %p45, %p46
      %p48 = scmp.ne.s32.totalorder %s41, %s44
      %p49 = scmp.eq.s32.totalorder %s20, 0
      %p50 = por %p48, %p49
      %p51 = scmp.ne.s32.totalorder %s41, %s44
      %p52 = scmp.eq.s32.totalorder %s25, 1
      %p53 = por %p51, %p52
      %p55 = scmp.ne.s32.totalorder %s44, %s54
      %p56 = scmp.eq.s32.totalorder %s25, 0
      %p57 = por %p55, %p56
      %p58 = scmp.lt.s32.totalorder %s20, 2
      // Predicated region
      $region9: #{tpu_custom_call.1} parent=5 // pred_check
        %p59 = pneg %p58
      $region10: #{tpu_custom_call.1} parent=5 // pred_check_branch
        %61 = sbr.rel (%p59) target = $region12
      $region11: #{tpu_custom_call.1} parent=5 // pred_region
        %p62 = pneg %p50
        %p63 = pneg %p47
        %s64 = sand.u32 %s41, 1
        %s65 = scalar_lea.sflag [#allocation8], %s64
        %s66 = sand.u32 %s41, 1
        %s67 = smul.addr %s66, 8
        %s68 = scalar_lea.vmem [#allocation7], %s67
        %s69 = smul.u32 %s26, 8
        %s70 = smul.u32 %s27, 8
        %s71 = sadd.s32 %s69, %s70
        %s72 = sld [smem:[#allocation5 + %s71]]
        %p73 = scmp.gt.s32.totalorder %s72, 0
        %s74 = scalar_select %p73, %s72, 0
        %p75 = scmp.lt.s32.totalorder %s74, 15
        %s76 = scalar_select %p75, %s74, 15
        %s77 = smul.addr %s76, 16
        %s78 = scalar_lea.hbm %s2, %s77
        // Predicated region
        $region13: #{tpu_custom_call.1} parent=11 // pred_check
          _
        $region14: #{tpu_custom_call.1} parent=11 // pred_check_branch
          %80 = sbr.rel target = $region16
        $region15: #{tpu_custom_call.1} parent=11 // pred_region
          %81 = sst [smem:[#allocation11]] [#allocation10]
          %82 = sst [smem:[#allocation12]] [#allocation9]
        $region16: #{tpu_custom_call.1} parent=11 // pred_fallthru
          _
        %84 = shalt.err (0)
        %s86 = sshll.u32 [#allocation2], 4
        %s87 = int_to_ptr.vmem [resolvable:$true] %s86
        %89 = dma.hbm_to_vmem [thread:$0]  %s78, 16, %s87, [#allocation3]
        %s90 = sadd.s32 %s71, 1
        %s91 = sld [smem:[#allocation5 + %s90]]
        %p92 = scmp.gt.s32.totalorder %s91, 0
        %s93 = scalar_select %p92, %s91, 0
        %p94 = scmp.lt.s32.totalorder %s93, 15
        %s95 = scalar_select %p94, %s93, 15
        %s96 = smul.addr %s95, 16
        %s97 = scalar_lea.hbm %s2, %s96
        %s98 = scalar_lea.vmem [#allocation2], 1
        %s99 = scalar_lea.sflag [#allocation3], 1
        // Predicated region
        $region17: #{tpu_custom_call.1} parent=11 // pred_check
          _
        $region18: #{tpu_custom_call.1} parent=11 // pred_check_branch
          %101 = sbr.rel target = $region20
        $region19: #{tpu_custom_call.1} parent=11 // pred_region
          %102 = sst [smem:[#allocation11]] [#allocation14]
          %103 = sst [smem:[#allocation12]] [#allocation13]
        $region20: #{tpu_custom_call.1} parent=11 // pred_fallthru
          _
        %105 = shalt.err (0)
        %s107 = sshll.u32 %s98, 4
        %s108 = int_to_ptr.vmem [resolvable:$true] %s107
        %110 = dma.hbm_to_vmem [thread:$0]  %s97, 16, %s108, %s99
        %s111 = sadd.s32 %s71, 2
        %s112 = sld [smem:[#allocation5 + %s111]]
        %p113 = scmp.gt.s32.totalorder %s112, 0
        %s114 = scalar_select %p113, %s112, 0
        %p115 = scmp.lt.s32.totalorder %s114, 15
        %s116 = scalar_select %p115, %s114, 15
        %s117 = smul.addr %s116, 16
        %s118 = scalar_lea.hbm %s2, %s117
        %s119 = scalar_lea.vmem [#allocation2], 2
        %s120 = scalar_lea.sflag [#allocation3], 2
        // Predicated region
        $region21: #{tpu_custom_call.1} parent=11 // pred_check
          _
        $region22: #{tpu_custom_call.1} parent=11 // pred_check_branch
          %122 = sbr.rel target = $region24
        $region23: #{tpu_custom_call.1} parent=11 // pred_region
          %123 = sst [smem:[#allocation11]] [#allocation16]
          %124 = sst [smem:[#allocation12]] [#allocation15]
        $region24: #{tpu_custom_call.1} parent=11 // pred_fallthru
          _
        %126 = shalt.err (0)
        %s128 = sshll.u32 %s119, 4
        %s129 = int_to_ptr.vmem [resolvable:$true] %s128
        %131 = dma.hbm_to_vmem [thread:$0]  %s118, 16, %s129, %s120
        %s132 = sadd.s32 %s71, 3
        %s133 = sld [smem:[#allocation5 + %s132]]
        %p134 = scmp.gt.s32.totalorder %s133, 0
        %s135 = scalar_select %p134, %s133, 0
        %p136 = scmp.lt.s32.totalorder %s135, 15
        %s137 = scalar_select %p136, %s135, 15
        %s138 = smul.addr %s137, 16
        %s139 = scalar_lea.hbm %s2, %s138
        %s140 = scalar_lea.vmem [#allocation2], 3
        %s141 = scalar_lea.sflag [#allocation3], 3
        // Predicated region
        $region25: #{tpu_custom_call.1} parent=11 // pred_check
          _
        $region26: #{tpu_custom_call.1} parent=11 // pred_check_branch
          %143 = sbr.rel target = $region28
        $region27: #{tpu_custom_call.1} parent=11 // pred_region
          %144 = sst [smem:[#allocation11]] [#allocation18]
          %145 = sst [smem:[#allocation12]] [#allocation17]
        $region28: #{tpu_custom_call.1} parent=11 // pred_fallthru
          _
        %147 = shalt.err (0)
        %s149 = sshll.u32 %s140, 4
        %s150 = int_to_ptr.vmem [resolvable:$true] %s149
        %152 = dma.hbm_to_vmem [thread:$0]  %s139, 16, %s150, %s141
        %s153 = sadd.s32 %s71, 4
        %s154 = sld [smem:[#allocation5 + %s153]]
        %p155 = scmp.gt.s32.totalorder %s154, 0
        %s156 = scalar_select %p155, %s154, 0
        %p157 = scmp.lt.s32.totalorder %s156, 15
        %s158 = scalar_select %p157, %s156, 15
        %s159 = smul.addr %s158, 16
        %s160 = scalar_lea.hbm %s2, %s159
        %s161 = scalar_lea.vmem [#allocation2], 4
        %s162 = scalar_lea.sflag [#allocation3], 4
        // Predicated region
        $region29: #{tpu_custom_call.1} parent=11 // pred_check
          _
        $region30: #{tpu_custom_call.1} parent=11 // pred_check_branch
          %164 = sbr.rel target = $region32
        $region31: #{tpu_custom_call.1} parent=11 // pred_region
          %165 = sst [smem:[#allocation11]] [#allocation20]
          %166 = sst [smem:[#allocation12]] [#allocation19]
        $region32: #{tpu_custom_call.1} parent=11 // pred_fallthru
          _
        %168 = shalt.err (0)
        %s170 = sshll.u32 %s161, 4
        %s171 = int_to_ptr.vmem [resolvable:$true] %s170
        %173 = dma.hbm_to_vmem [thread:$0]  %s160, 16, %s171, %s162
        %s174 = sadd.s32 %s71, 5
        %s175 = sld [smem:[#allocation5 + %s174]]
        %p176 = scmp.gt.s32.totalorder %s175, 0
        %s177 = scalar_select %p176, %s175, 0
        %p178 = scmp.lt.s32.totalorder %s177, 15
        %s179 = scalar_select %p178, %s177, 15
        %s180 = smul.addr %s179, 16
        %s181 = scalar_lea.hbm %s2, %s180
        %s182 = scalar_lea.vmem [#allocation2], 5
        %s183 = scalar_lea.sflag [#allocation3], 5
        // Predicated region
        $region33: #{tpu_custom_call.1} parent=11 // pred_check
          _
        $region34: #{tpu_custom_call.1} parent=11 // pred_check_branch
          %185 = sbr.rel target = $region36
        $region35: #{tpu_custom_call.1} parent=11 // pred_region
          %186 = sst [smem:[#allocation11]] [#allocation22]
          %187 = sst [smem:[#allocation12]] [#allocation21]
        $region36: #{tpu_custom_call.1} parent=11 // pred_fallthru
          _
        %189 = shalt.err (0)
        %s191 = sshll.u32 %s182, 4
        %s192 = int_to_ptr.vmem [resolvable:$true] %s191
        %194 = dma.hbm_to_vmem [thread:$0]  %s181, 16, %s192, %s183
        %s195 = sadd.s32 %s71, 6
        %s196 = sld [smem:[#allocation5 + %s195]]
        %p197 = scmp.gt.s32.totalorder %s196, 0
        %s198 = scalar_select %p197, %s196, 0
        %p199 = scmp.lt.s32.totalorder %s198, 15
        %s200 = scalar_select %p199, %s198, 15
        %s201 = smul.addr %s200, 16
        %s202 = scalar_lea.hbm %s2, %s201
        %s203 = scalar_lea.vmem [#allocation2], 6
        %s204 = scalar_lea.sflag [#allocation3], 6
        // Predicated region
        $region37: #{tpu_custom_call.1} parent=11 // pred_check
          _
        $region38: #{tpu_custom_call.1} parent=11 // pred_check_branch
          %206 = sbr.rel target = $region40
        $region39: #{tpu_custom_call.1} parent=11 // pred_region
          %207 = sst [smem:[#allocation11]] [#allocation24]
          %208 = sst [smem:[#allocation12]] [#allocation23]
        $region40: #{tpu_custom_call.1} parent=11 // pred_fallthru
          _
        %210 = shalt.err (0)
        %s212 = sshll.u32 %s203, 4
        %s213 = int_to_ptr.vmem [resolvable:$true] %s212
        %215 = dma.hbm_to_vmem [thread:$0]  %s202, 16, %s213, %s204
        %s216 = sadd.s32 %s71, 7
        %s217 = sld [smem:[#allocation5 + %s216]]
        %p218 = scmp.gt.s32.totalorder %s217, 0
        %s219 = scalar_select %p218, %s217, 0
        %p220 = scmp.lt.s32.totalorder %s219, 15
        %s221 = scalar_select %p220, %s219, 15
        %s222 = smul.addr %s221, 16
        %s223 = scalar_lea.hbm %s2, %s222
        %s224 = scalar_lea.vmem [#allocation2], 7
        %s225 = scalar_lea.sflag [#allocation3], 7
        // Predicated region
        $region41: #{tpu_custom_call.1} parent=11 // pred_check
          _
        $region42: #{tpu_custom_call.1} parent=11 // pred_check_branch
          %227 = sbr.rel target = $region44
        $region43: #{tpu_custom_call.1} parent=11 // pred_region
          %228 = sst [smem:[#allocation11]] [#allocation26]
          %229 = sst [smem:[#allocation12]] [#allocation25]
        $region44: #{tpu_custom_call.1} parent=11 // pred_fallthru
          _
        %231 = shalt.err (0)
        %s233 = sshll.u32 %s224, 4
        %s234 = int_to_ptr.vmem [resolvable:$true] %s233
        %236 = dma.hbm_to_vmem [thread:$0]  %s223, 16, %s234, %s225
        %s237 = smul.u32 1, 1
        %s238 = sshll.u32 %s237, 4
        %239 = dma.done [#allocation3], %s238
        %s240 = sshll.u32 %s237, 4
        %241 = dma.done %s99, %s240
        %s242 = sshll.u32 %s237, 4
        %243 = dma.done %s120, %s242
        %s244 = sshll.u32 %s237, 4
        %245 = dma.done %s141, %s244
        %s246 = sshll.u32 %s237, 4
        %247 = dma.done %s162, %s246
        %s248 = sshll.u32 %s237, 4
        %249 = dma.done %s183, %s248
        %s250 = sshll.u32 %s237, 4
        %251 = dma.done %s204, %s250
        %s252 = sshll.u32 %s237, 4
        %253 = dma.done %s225, %s252
        %v254 = vlaneseq
        %v255 = vshrl.u32 %v254, 7
        %v256 = vstv %s70
        %v257 = vadd.s32 %v256, %v255
        %s258 = sld [smem:[#allocation6 + %s26]]
        %v259 = vstv %s258
        %vm260 = vcmp.lt.s32.totalorder %v257, %v259
        %v261 = vld [vmem:[#allocation2] sm:$0xff]
        %v262 = vsel %vm260, 1, 0
        %vm263 = vcmp.eq.s32.totalorder %v262, 1
        %v264 = vsel %vm263, %v261, 0.0
        %265 = vst [vmem:[%s68] sm:$0xff] %v264
        %s266 = sand.u32 %s41, 1
        %s267 = scalar_lea.sflag [#allocation8], %s266
        %s268 = sand.u32 %s41, 1
        %s269 = smul.addr %s268, 8
        %s270 = scalar_lea.vmem [#allocation7], %s269
        // Predicated region
        $region45: #{tpu_custom_call.1} parent=11 // pred_check
          %p271 = pneg %p47
        $region46: #{tpu_custom_call.1} parent=11 // pred_check_branch
          %273 = sbr.rel (%p271) target = $region48
        $region47: #{tpu_custom_call.1} parent=11 // pred_region
          %s275 = ssub.s32 128, 128
          %276 = vsyncadd %s267, %s275
          %s277 = sadd.s32 %s27, %s26
          %s278 = smul.addr %s277, 128
          %s279 = scalar_lea.hbm %s3, %s278
          %s281 = sshll.u32 %s270, 4
          %s282 = int_to_ptr.vmem [resolvable:$true] %s281
          %284 = dma.vmem_to_hbm [thread:$0]  %s282, 128, %s279, %s267
        $region48: #{tpu_custom_call.1} parent=11 // pred_fallthru
          _
      $region12: #{tpu_custom_call.1} parent=5 // pred_fallthru
        _
      %p285 = scmp.le.s32.totalorder 1, %s20
      // Predicated region
      $region49: #{tpu_custom_call.1} parent=5 // pred_check
        %p286 = pneg %p285
      $region50: #{tpu_custom_call.1} parent=5 // pred_check_branch
        %288 = sbr.rel (%p286) target = $region52
      $region51: #{tpu_custom_call.1} parent=5 // pred_region
        %s289 = ssub.s32 %s20, 1
        // Predicated region
        $region53: #{tpu_custom_call.1} parent=51 // pred_check
          %p290 = pneg %p53
        $region54: #{tpu_custom_call.1} parent=51 // pred_check_branch
          %292 = sbr.rel (%p290) target = $region56
        $region55: #{tpu_custom_call.1} parent=51 // pred_region
          %s293 = sand.u32 %s44, 1
          %s294 = scalar_lea.sflag [#allocation8], %s293
          %s295 = sand.u32 %s44, 1
          %s296 = smul.addr %s295, 8
          %s297 = scalar_lea.vmem [#allocation7], %s296
          %298 = dma.done %s294, 128
        $region56: #{tpu_custom_call.1} parent=51 // pred_fallthru
          _
      $region52: #{tpu_custom_call.1} parent=5 // pred_fallthru
        _
    $region6: #{tpu_custom_call.1} parent=1 // loop_footer
      %s24 = sadd.s32 1, %s20
    $region7: #{tpu_custom_call.1} parent=1 // loop_footer_branch
      %19 = sbr.rel target = $region3
    $region8: #{tpu_custom_call.1} parent=1 // loop_exit
      _
    %299 = vsyncpa [#allocation8], 1
    %s300 = scalar_lea.sflag [#allocation8], 1
    %301 = vsyncpa %s300, 1
  %302 = vsyncmov [#allocation3]
  %s303 = vpop.sfrf %302
  %p304 = scmp.eq.s32.totalorder %s303, 0
  %p305 = pneg %p304
  %307 = shalt.err (%p305)
  %s308 = scalar_lea.sflag [#allocation3], 1
  %309 = vsyncmov %s308
  %s310 = vpop.sfrf %309
  %p311 = scmp.eq.s32.totalorder %s310, 0
  %p312 = pneg %p311
  %314 = shalt.err (%p312)
  %s315 = scalar_lea.sflag [#allocation3], 2
  %316 = vsyncmov %s315
  %s317 = vpop.sfrf %316
  %p318 = scmp.eq.s32.totalorder %s317, 0
  %p319 = pneg %p318
  %321 = shalt.err (%p319)
  %s322 = scalar_lea.sflag [#allocation3], 3
  %323 = vsyncmov %s322
  %s324 = vpop.sfrf %323
  %p325 = scmp.eq.s32.totalorder %s324, 0
  %p326 = pneg %p325
  %328 = shalt.err (%p326)
  %s329 = scalar_lea.sflag [#allocation3], 4
  %330 = vsyncmov %s329
  %s331 = vpop.sfrf %330
  %p332 = scmp.eq.s32.totalorder %s331, 0
  %p333 = pneg %p332
  %335 = shalt.err (%p333)
  %s336 = scalar_lea.sflag [#allocation3], 5
  %337 = vsyncmov %s336
  %s338 = vpop.sfrf %337
  %p339 = scmp.eq.s32.totalorder %s338, 0
  %p340 = pneg %p339
  %342 = shalt.err (%p340)
  %s343 = scalar_lea.sflag [#allocation3], 6
  %344 = vsyncmov %s343
  %s345 = vpop.sfrf %344
  %p346 = scmp.eq.s32.totalorder %s345, 0
  %p347 = pneg %p346
  %349 = shalt.err (%p347)
  %s350 = scalar_lea.sflag [#allocation3], 7
  %351 = vsyncmov %s350
  %s352 = vpop.sfrf %351
  %p353 = scmp.eq.s32.totalorder %s352, 0
  %p354 = pneg %p353
  %356 = shalt.err (%p354)

</llo_original>
